<compile_context>
chip_gen: v5e
topology: v5e:2x2
jax: 0.10.0
libtpu: 0.0.40
codegen_flags: <defaults>
</compile_context>

<pallas_src>
import jax
import jax.numpy as jnp
from jax.experimental import pallas as pl
from jax.experimental.pallas import tpu as pltpu


# ---------------------------------------------------------------------------
# Fused kernel: graph path (conv -> conv1x1 -> tanh -> Linear -> PReLU) and
# x_trans path (DataTrans1 -> DataTrans) in a single grid-less invocation.
# ---------------------------------------------------------------------------
def _fused_kernel(xcat_ref, wck_ref, bc_ref, wc1_ref, wl_ref, bl_ref,
                  xwin_ref, w1_ref, b1_ref, w2_ref, b2_ref,
                  bc1_ref, alpha_ref,
                  graph_ref, trans_ref):
    # ---- graph path --------------------------------------------------------
    # im2col'd conv as one matmul: (d_half, lag*d) x (lag*d, N*Lout)
    acc = jnp.dot(wck_ref[...], xcat_ref[...],
                  preferred_element_type=jnp.float32) + bc_ref[...]     # (d_half, N*Lout)
    # 1x1 conv == channel matmul; conv1 bias is a true scalar from SMEM.
    xc1 = jnp.dot(wc1_ref[...], acc,
                  preferred_element_type=jnp.float32) + bc1_ref[0]      # (1, N*Lout)
    h = jnp.tanh(xc1)
    # Linear for both batch elements at once via block-diagonal weight.
    g = jnp.dot(h, wl_ref[...],
                preferred_element_type=jnp.float32) + bl_ref[...]       # (1, N*F)
    alpha = alpha_ref[0]
    graph_ref[...] = jnp.where(g >= 0, g, alpha * g)                    # one lane-dense store

    # ---- x_trans path: both tanh stages over all windows at once -----------
    t1 = jnp.tanh(xwin_ref[...] * w1_ref[...] + b1_ref[...])            # (s, d*lag) DataTrans1
    trans_ref[...] = jnp.tanh(t1 * w2_ref[...] + b2_ref[...])           # (s, d*lag) DataTrans


def data_trans_forward(x, x_lag, Wc, bc, Wc1, bc1, Wl, bl, alpha, W1, B1, W2, B2):
    N, d, L = x.shape
    d_half, _, lag = Wc.shape
    Lout = L - lag + 1
    F = Wl.shape[0]
    T = x_lag.shape[1]
    s = T - lag + 1
    f32 = jnp.float32

    # -- im2col of the conv input, batch folded into the column (lane) axis:
    #    x_cat[k*d + c, n*Lout + l] = x[n, c, k + l]
    cols = jnp.concatenate([x[:, :, k:k + Lout] for k in range(lag)], axis=1)   # (N, lag*d, Lout)
    x_cat = jnp.transpose(cols, (1, 0, 2)).reshape(lag * d, N * Lout)

    # conv weight flattened to match the im2col ordering: wck_flat[o, k*d+c] = Wc[o, c, k]
    wck_flat = jnp.transpose(Wc, (0, 2, 1)).reshape(d_half, lag * d).astype(f32)
    bc2 = bc.reshape(d_half, 1).astype(f32)
    wc1 = Wc1[:, :, 0].astype(f32)                                              # (1, d_half)

    # Linear folded into a block-diagonal weight so both batch elements come out of
    # a single (1, N*F) lane-dense matmul.
    wl_blk = jnp.kron(jnp.eye(N, dtype=f32), Wl.T.astype(f32))                  # (N*Lout, N*F)
    bl_tiled = jnp.tile(bl.reshape(1, F).astype(f32), (1, N))                   # (1, N*F)

    # -- all sliding windows of x_lag, lane-dense: x_win[i, c*lag + j] = x_lag[c, i+j]
    x_win = jnp.stack([x_lag[:, i:i + lag] for i in range(s)], axis=0)          # (s, d, lag)
    x_win = x_win.reshape(s, d * lag).astype(f32)
    w1f = W1.reshape(1, d * lag).astype(f32)
    b1f = B1.reshape(1, d * lag).astype(f32)
    w2f = W2.reshape(1, d * lag).astype(f32)
    b2f = B2.reshape(1, d * lag).astype(f32)

    bc1_s = bc1.reshape(1).astype(f32)
    alpha_s = alpha.reshape(1).astype(f32)

    vmem = pl.BlockSpec(memory_space=pltpu.MemorySpace.VMEM)
    smem = pl.BlockSpec(memory_space=pltpu.MemorySpace.SMEM)

    inputs = (x_cat, wck_flat, bc2, wc1, wl_blk, bl_tiled,
              x_win, w1f, b1f, w2f, b2f, bc1_s, alpha_s)

    flops = 2 * (d_half * (lag * d) * (N * Lout)        # merged conv matmul
                 + d_half * (N * Lout)                  # 1x1 conv
                 + (N * Lout) * (N * F))                # block-diagonal Linear
    flops += 4 * s * d * lag                            # two fused mul-adds in trans path
    transcendentals = N * Lout + 2 * s * d * lag
    bytes_accessed = 4 * (sum(int(a.size) for a in inputs) + N * F + s * d * lag)

    graph_flat, trans_flat = pl.pallas_call(
        _fused_kernel,
        out_shape=(jax.ShapeDtypeStruct((1, N * F), f32),
                   jax.ShapeDtypeStruct((s, d * lag), f32)),
        in_specs=[vmem] * 11 + [smem, smem],
        out_specs=(vmem, vmem),
        cost_estimate=pl.CostEstimate(flops=flops,
                                      transcendentals=transcendentals,
                                      bytes_accessed=bytes_accessed),
    )(*inputs)

    graph = graph_flat.reshape(N, 1, F)
    x_trans = trans_flat.reshape(s, d, lag)
    return graph, x_trans


# ---------------------------------------------------------------------------
# Pure-JAX reference of the PyTorch forward (for correctness checking only).
# ---------------------------------------------------------------------------
def reference(x, x_lag, Wc, bc, Wc1, bc1, Wl, bl, alpha, W1, B1, W2, B2):
    N, d, L = x.shape
    d_half, _, lag = Wc.shape
    Lout = L - lag + 1
    cols = jnp.stack([x[:, :, k:k + Lout] for k in range(lag)], axis=-1)    # (N,d,Lout,lag)
    x_cov = jnp.einsum('ndlk,odk->nol', cols, Wc) + bc[None, :, None]
    x_c1 = jnp.einsum('nol,po->npl', x_cov, Wc1[:, :, 0]) + bc1[None, :, None]
    h = jnp.tanh(x_c1)
    g = jnp.einsum('npl,fl->npf', h, Wl) + bl
    graph = jnp.where(g >= 0, g, alpha.reshape(()) * g)

    s = x_lag.shape[1] - lag + 1
    t1 = jnp.stack([jnp.tanh(x_lag[:, i:i + lag] * W1 + B1) for i in range(s)], axis=0)
    x_trans = jnp.tanh(t1 * W2[0] + B2[0])
    return graph, x_trans


if __name__ == "__main__":
    # Synthetic args: data_dim=4, max_lag=3, batch_size=16
    d = 4
    max_lag = 3
    lag = max_lag + 1
    batch_size = 16
    N = 2
    d_half = d // 2
    Lout = batch_size - max_lag          # = 13, Linear in_features
    F = d * d * lag                      # = 64, Linear out_features

    key = jax.random.PRNGKey(0)
    ks = jax.random.split(key, 12)
    x = jax.random.normal(ks[0], (N, d, batch_size), jnp.float32)
    x_lag = jax.random.normal(ks[1], (d, batch_size), jnp.float32)

    # Deterministic synthetic parameters (shapes from the module's __init__).
    Wc = jax.random.normal(ks[2], (d_half, d, lag), jnp.float32) * 0.1   # conv weight
    bc = jax.random.normal(ks[3], (d_half,), jnp.float32) * 0.1          # conv bias
    Wc1 = jax.random.normal(ks[4], (1, d_half, 1), jnp.float32) * 0.1    # conv1 weight
    bc1 = jax.random.normal(ks[5], (1,), jnp.float32) * 0.1              # conv1 bias
    Wl = jax.random.normal(ks[6], (F, Lout), jnp.float32) * 0.1          # Linear weight
    bl = jax.random.normal(ks[7], (F,), jnp.float32) * 0.1               # Linear bias
    alpha = jnp.array([0.25], jnp.float32)                               # nn.PReLU() default
    W1 = jax.random.normal(ks[8], (d, lag), jnp.float32)                 # DataTrans1 weight
    B1 = jax.random.normal(ks[9], (d, lag), jnp.float32)                 # DataTrans1 bias
    W2 = jax.random.normal(ks[10], (1, d, lag), jnp.float32)             # DataTrans weight
    B2 = jax.random.normal(ks[11], (1, d, lag), jnp.float32)             # DataTrans bias

    graph, x_trans = data_trans_forward(
        x, x_lag, Wc, bc, Wc1, bc1, Wl, bl, alpha, W1, B1, W2, B2)
    jax.block_until_ready((graph, x_trans))

    g_ref, t_ref = reference(x, x_lag, Wc, bc, Wc1, bc1, Wl, bl, alpha, W1, B1, W2, B2)

    assert graph.shape == (N, 1, F), graph.shape
    assert x_trans.shape == (batch_size - max_lag, d, lag), x_trans.shape
    # Tightened vs the previous 2e-2; 1e-3 leaves headroom for the MXU's default
    # f32 (bf16-pass) matmul precision on either the kernel or the XLA reference.
    assert jnp.allclose(graph, g_ref, atol=1e-3, rtol=1e-3)
    assert jnp.allclose(x_trans, t_ref, atol=1e-4, rtol=1e-4)

    print("KERNEL_OK")
</pallas_src>

<mosaic_0001>
module attributes {stable_mosaic.version = 11 : i64} {
  func.func @_fused_kernel(%arg0: memref<16x26xf32, #tpu.memory_space<vmem>>, %arg1: memref<2x16xf32, #tpu.memory_space<vmem>>, %arg2: memref<2x1xf32, #tpu.memory_space<vmem>>, %arg3: memref<1x2xf32, #tpu.memory_space<vmem>>, %arg4: memref<26x128xf32, #tpu.memory_space<vmem>>, %arg5: memref<1x128xf32, #tpu.memory_space<vmem>>, %arg6: memref<13x16xf32, #tpu.memory_space<vmem>>, %arg7: memref<1x16xf32, #tpu.memory_space<vmem>>, %arg8: memref<1x16xf32, #tpu.memory_space<vmem>>, %arg9: memref<1x16xf32, #tpu.memory_space<vmem>>, %arg10: memref<1x16xf32, #tpu.memory_space<vmem>>, %arg11: memref<1xf32, #tpu.memory_space<smem>>, %arg12: memref<1xf32, #tpu.memory_space<smem>>, %arg13: memref<1x128xf32, #tpu.memory_space<vmem>>, %arg14: memref<13x16xf32, #tpu.memory_space<vmem>>) attributes {dimension_semantics = [], scalar_prefetch = 0 : i64, scratch_operands = 0 : i64, tpu.core_type = #tpu.core_type<tc>} {
    %c0 = arith.constant 0 : index
    %c0_0 = arith.constant 0 : index
    %0 = vector.load %arg1[%c0, %c0_0] : memref<2x16xf32, #tpu.memory_space<vmem>>, vector<2x16xf32>
    %c0_1 = arith.constant 0 : index
    %c0_2 = arith.constant 0 : index
    %1 = vector.load %arg0[%c0_1, %c0_2] : memref<16x26xf32, #tpu.memory_space<vmem>>, vector<16x26xf32>
    %cst = arith.constant dense<0.000000e+00> : vector<2x26xf32>
    %2 = tpu.matmul %0, %1, %cst {dimension_numbers = #tpu.dot_dimension_numbers<[1], [0], [0], [1], [0, 0, 1, 1], [], []>} : vector<2x16xf32>, vector<16x26xf32>, vector<2x26xf32> -> vector<2x26xf32>
    %c0_3 = arith.constant 0 : index
    %c0_4 = arith.constant 0 : index
    %3 = vector.load %arg2[%c0_3, %c0_4] : memref<2x1xf32, #tpu.memory_space<vmem>>, vector<2x1xf32>
    %4 = vector.broadcast %3 : vector<2x1xf32> to vector<2x26xf32>
    %5 = arith.addf %2, %4 : vector<2x26xf32>
    %c0_5 = arith.constant 0 : index
    %c0_6 = arith.constant 0 : index
    %6 = vector.load %arg3[%c0_5, %c0_6] : memref<1x2xf32, #tpu.memory_space<vmem>>, vector<1x2xf32>
    %cst_7 = arith.constant dense<0.000000e+00> : vector<1x26xf32>
    %7 = tpu.matmul %6, %5, %cst_7 {dimension_numbers = #tpu.dot_dimension_numbers<[1], [0], [0], [1], [0, 0, 1, 1], [], []>} : vector<1x2xf32>, vector<2x26xf32>, vector<1x26xf32> -> vector<1x26xf32>
    %c0_8 = arith.constant 0 : index
    %8 = memref.load %arg11[%c0_8] : memref<1xf32, #tpu.memory_space<smem>>
    %9 = vector.broadcast %8 : f32 to vector<1x26xf32>
    %10 = arith.addf %7, %9 : vector<1x26xf32>
    %11 = math.tanh %10 : vector<1x26xf32>
    %c0_9 = arith.constant 0 : index
    %c0_10 = arith.constant 0 : index
    %12 = vector.load %arg4[%c0_9, %c0_10] : memref<26x128xf32, #tpu.memory_space<vmem>>, vector<26x128xf32>
    %cst_11 = arith.constant dense<0.000000e+00> : vector<1x128xf32>
    %13 = tpu.matmul %11, %12, %cst_11 {dimension_numbers = #tpu.dot_dimension_numbers<[1], [0], [0], [1], [0, 0, 1, 1], [], []>} : vector<1x26xf32>, vector<26x128xf32>, vector<1x128xf32> -> vector<1x128xf32>
    %c0_12 = arith.constant 0 : index
    %c0_13 = arith.constant 0 : index
    %14 = vector.load %arg5[%c0_12, %c0_13] : memref<1x128xf32, #tpu.memory_space<vmem>>, vector<1x128xf32>
    %15 = arith.addf %13, %14 : vector<1x128xf32>
    %c0_14 = arith.constant 0 : index
    %16 = memref.load %arg12[%c0_14] : memref<1xf32, #tpu.memory_space<smem>>
    %cst_15 = arith.constant 0.000000e+00 : f32
    %17 = vector.broadcast %cst_15 : f32 to vector<1x128xf32>
    %18 = arith.cmpf oge, %15, %17 : vector<1x128xf32>
    %19 = vector.broadcast %16 : f32 to vector<1x128xf32>
    %20 = arith.mulf %19, %15 : vector<1x128xf32>
    %21 = arith.select %18, %15, %20 : vector<1x128xi1>, vector<1x128xf32>
    %c0_16 = arith.constant 0 : index
    %c0_17 = arith.constant 0 : index
    %22 = vector.load %arg13[%c0_16, %c0_17] : memref<1x128xf32, #tpu.memory_space<vmem>>, vector<1x128xf32>
    tpu.vector_store %arg13[%c0_16, %c0_17], %21 {strides = array<i32>} : memref<1x128xf32, #tpu.memory_space<vmem>>, vector<1x128xf32>,
    %c0_18 = arith.constant 0 : index
    %c0_19 = arith.constant 0 : index
    %23 = vector.load %arg6[%c0_18, %c0_19] : memref<13x16xf32, #tpu.memory_space<vmem>>, vector<13x16xf32>
    %c0_20 = arith.constant 0 : index
    %c0_21 = arith.constant 0 : index
    %24 = vector.load %arg7[%c0_20, %c0_21] : memref<1x16xf32, #tpu.memory_space<vmem>>, vector<1x16xf32>
    %25 = vector.broadcast %24 : vector<1x16xf32> to vector<13x16xf32>
    %26 = arith.mulf %23, %25 : vector<13x16xf32>
    %c0_22 = arith.constant 0 : index
    %c0_23 = arith.constant 0 : index
    %27 = vector.load %arg8[%c0_22, %c0_23] : memref<1x16xf32, #tpu.memory_space<vmem>>, vector<1x16xf32>
    %28 = vector.broadcast %27 : vector<1x16xf32> to vector<13x16xf32>
    %29 = arith.addf %26, %28 : vector<13x16xf32>
    %30 = math.tanh %29 : vector<13x16xf32>
    %c0_24 = arith.constant 0 : index
    %c0_25 = arith.constant 0 : index
    %31 = vector.load %arg9[%c0_24, %c0_25] : memref<1x16xf32, #tpu.memory_space<vmem>>, vector<1x16xf32>
    %32 = vector.broadcast %31 : vector<1x16xf32> to vector<13x16xf32>
    %33 = arith.mulf %30, %32 : vector<13x16xf32>
    %c0_26 = arith.constant 0 : index
    %c0_27 = arith.constant 0 : index
    %34 = vector.load %arg10[%c0_26, %c0_27] : memref<1x16xf32, #tpu.memory_space<vmem>>, vector<1x16xf32>
    %35 = vector.broadcast %34 : vector<1x16xf32> to vector<13x16xf32>
    %36 = arith.addf %33, %35 : vector<13x16xf32>
    %37 = math.tanh %36 : vector<13x16xf32>
    %c0_28 = arith.constant 0 : index
    %c0_29 = arith.constant 0 : index
    %38 = vector.load %arg14[%c0_28, %c0_29] : memref<13x16xf32, #tpu.memory_space<vmem>>, vector<13x16xf32>
    tpu.vector_store %arg14[%c0_28, %c0_29], %37 {strides = array<i32>} : memref<13x16xf32, #tpu.memory_space<vmem>>, vector<13x16xf32>,
    return
  }
}

</mosaic_0001>

<llo_original>
// kernel: tpu_custom_call.1
$region0: #{tpu_custom_call.1}
  #allocation0 [shape = 'u32[]', space=smem, size = 0x4, offset = 0x4, fixed_abs, tag = 'smem constant byte address 0x4 - core index']
  #allocation1 [shape = 'u32[72,128]{1,0:T(1,128)}', space=vmem, size = 0x9000, scoped, tag = 'internal scratch']
  #allocation2 [shape = 'f32[1]{0:T(128)S(6)}', space=smem, size = 0x200, scoped, tag = 'scoped memory for tpu_custom_call.1']
  #allocation3 [shape = 'f32[1]{0:T(128)S(6)}', space=smem, size = 0x200, scoped, tag = 'scoped memory for tpu_custom_call.1']
  %s0 = inlined_call_operand.hbm [shape: f32[16,26], index: 0, kind: input, shape index: {}]
  %s1 = inlined_call_operand.vmem [shape: f32[2,16], index: 1, kind: input, shape index: {}]
  %s2 = inlined_call_operand.vmem [shape: f32[2,1], index: 2, kind: input, shape index: {}]
  %s3 = inlined_call_operand.vmem [shape: f32[1,2], index: 3, kind: input, shape index: {}]
  %s4 = inlined_call_operand.hbm [shape: f32[26,128], index: 4, kind: input, shape index: {}]
  %s5 = inlined_call_operand.vmem [shape: f32[1,128], index: 5, kind: input, shape index: {}]
  %s6 = inlined_call_operand.hbm [shape: f32[13,16], index: 6, kind: input, shape index: {}]
  %s7 = inlined_call_operand.vmem [shape: f32[1,16], index: 7, kind: input, shape index: {}]
  %s8 = inlined_call_operand.vmem [shape: f32[1,16], index: 8, kind: input, shape index: {}]
  %s9 = inlined_call_operand.vmem [shape: f32[1,16], index: 9, kind: input, shape index: {}]
  %s10 = inlined_call_operand.vmem [shape: f32[1,16], index: 10, kind: input, shape index: {}]
  %s11 = inlined_call_operand.<no memory space> [shape: f32[1], index: 11, kind: input, shape index: {}]
  %s12 = inlined_call_operand.<no memory space> [shape: f32[1], index: 12, kind: input, shape index: {}]
  %s13 = inlined_call_operand.hbm [shape: f32[1,128], index: 13, kind: output, shape index: {0}]
  %s14 = inlined_call_operand.hbm [shape: f32[13,16], index: 14, kind: output, shape index: {1}]
  %15 = xla_tuple %s13, %s14
  %s16 = sld [smem:[#allocation0]]
  $region82: #{tpu_custom_call.1} parent=0
    _
  %s18 = ssub.s32 1, %s16
  %s19 = scalar_select 0, %s18, %s16
  %20 = sst [smem:[#allocation2]] %s11
  %21 = sst [smem:[#allocation3]] %s12
  $region1: #{tpu_custom_call.1} parent=0
    #allocation4 [shape = 'u8[8192]{0}', space=vmem, size = 0x2000, scoped, tag = 'input window, operand 0, single buffered']
    #allocation5 [shape = 's32[1]{0}', space=sflag, size = 0x4, scoped, tag = 'scoped memory for tpu_custom_call.1']
    #allocation6 [shape = 's32[1]{0}', space=sflag, size = 0x4, scoped, tag = 'scoped memory for tpu_custom_call.1']
    #allocation7 [shape = 'u8[16384]{0}', space=vmem, size = 0x4000, scoped, tag = 'input window, operand 4, single buffered']
    #allocation8 [shape = 's32[1]{0}', space=sflag, size = 0x4, scoped, tag = 'scoped memory for tpu_custom_call.1']
    #allocation9 [shape = 'u8[8192]{0}', space=vmem, size = 0x2000, scoped, tag = 'input window, operand 6, single buffered']
    #allocation10 [shape = 'u8[512]{0}', space=vmem, size = 0x400, scoped, tag = 'output window, operand 0, single buffered']
    #allocation11 [shape = 'u8[8192]{0}', space=vmem, size = 0x2000, scoped, tag = 'output window, operand 1, single buffered']
    #allocation12 [shape = 's32[1]{0}', space=sflag, size = 0x4, scoped, tag = 'scoped memory for tpu_custom_call.1']
    %22 = vsyncpa [#allocation5], 0
    %23 = vsyncpa [#allocation8], 0
    %24 = vsyncpa [#allocation6], 0
    %25 = vsyncpa [#allocation12], 0
    // Predicated region
    $region2: #{tpu_custom_call.1} parent=1 // pred_check
      _
    $region3: #{tpu_custom_call.1} parent=1 // pred_check_branch
      %27 = sbr.rel (0) target = $region5
    $region4: #{tpu_custom_call.1} parent=1 // pred_region
      %29 = vsyncadd [#allocation5], 0
      %s30 = sshll.u32 %s0, 4
      %s31 = int_to_ptr.hbm [resolvable:$true] %s30
      %s32 = sshll.u32 [#allocation4], 4
      %s33 = int_to_ptr.vmem [resolvable:$true] %s32
      %38 = dma.hbm_to_vmem [thread:$0]  %s31, 256, %s33, [#allocation5], 128, 128, 8
    $region5: #{tpu_custom_call.1} parent=1 // pred_fallthru
      _
    // Predicated region
    $region6: #{tpu_custom_call.1} parent=1 // pred_check
      _
    $region7: #{tpu_custom_call.1} parent=1 // pred_check_branch
      %40 = sbr.rel (0) target = $region9
    $region8: #{tpu_custom_call.1} parent=1 // pred_region
      _
    $region9: #{tpu_custom_call.1} parent=1 // pred_fallthru
      _
    // Predicated region
    $region10: #{tpu_custom_call.1} parent=1 // pred_check
      _
    $region11: #{tpu_custom_call.1} parent=1 // pred_check_branch
      %42 = sbr.rel (0) target = $region13
    $region12: #{tpu_custom_call.1} parent=1 // pred_region
      _
    $region13: #{tpu_custom_call.1} parent=1 // pred_fallthru
      _
    // Predicated region
    $region14: #{tpu_custom_call.1} parent=1 // pred_check
      _
    $region15: #{tpu_custom_call.1} parent=1 // pred_check_branch
      %44 = sbr.rel (0) target = $region17
    $region16: #{tpu_custom_call.1} parent=1 // pred_region
      _
    $region17: #{tpu_custom_call.1} parent=1 // pred_fallthru
      _
    // Predicated region
    $region18: #{tpu_custom_call.1} parent=1 // pred_check
      _
    $region19: #{tpu_custom_call.1} parent=1 // pred_check_branch
      %46 = sbr.rel (0) target = $region21
    $region20: #{tpu_custom_call.1} parent=1 // pred_region
      %48 = vsyncadd [#allocation8], 0
      %s49 = sshll.u32 %s4, 4
      %s50 = int_to_ptr.hbm [resolvable:$true] %s49
      %s51 = sshll.u32 [#allocation7], 4
      %s52 = int_to_ptr.vmem [resolvable:$true] %s51
      %57 = dma.hbm_to_vmem [thread:$0]  %s50, 512, %s52, [#allocation8], 128, 128, 8
    $region21: #{tpu_custom_call.1} parent=1 // pred_fallthru
      _
    // Predicated region
    $region22: #{tpu_custom_call.1} parent=1 // pred_check
      _
    $region23: #{tpu_custom_call.1} parent=1 // pred_check_branch
      %59 = sbr.rel (0) target = $region25
    $region24: #{tpu_custom_call.1} parent=1 // pred_region
      _
    $region25: #{tpu_custom_call.1} parent=1 // pred_fallthru
      _
    // Predicated region
    $region26: #{tpu_custom_call.1} parent=1 // pred_check
      _
    $region27: #{tpu_custom_call.1} parent=1 // pred_check_branch
      %61 = sbr.rel (0) target = $region29
    $region28: #{tpu_custom_call.1} parent=1 // pred_region
      %63 = vsyncadd [#allocation8], 0
      %s64 = sshll.u32 %s6, 4
      %s65 = int_to_ptr.hbm [resolvable:$true] %s64
      %s66 = sshll.u32 [#allocation9], 4
      %s67 = int_to_ptr.vmem [resolvable:$true] %s66
      %72 = dma.hbm_to_vmem [thread:$0]  %s65, 256, %s67, [#allocation8], 128, 128, 8
    $region29: #{tpu_custom_call.1} parent=1 // pred_fallthru
      _
    // Predicated region
    $region30: #{tpu_custom_call.1} parent=1 // pred_check
      _
    $region31: #{tpu_custom_call.1} parent=1 // pred_check_branch
      %74 = sbr.rel (0) target = $region33
    $region32: #{tpu_custom_call.1} parent=1 // pred_region
      _
    $region33: #{tpu_custom_call.1} parent=1 // pred_fallthru
      _
    // Predicated region
    $region34: #{tpu_custom_call.1} parent=1 // pred_check
      _
    $region35: #{tpu_custom_call.1} parent=1 // pred_check_branch
      %76 = sbr.rel (0) target = $region37
    $region36: #{tpu_custom_call.1} parent=1 // pred_region
      _
    $region37: #{tpu_custom_call.1} parent=1 // pred_fallthru
      _
    // Predicated region
    $region38: #{tpu_custom_call.1} parent=1 // pred_check
      _
    $region39: #{tpu_custom_call.1} parent=1 // pred_check_branch
      %78 = sbr.rel (0) target = $region41
    $region40: #{tpu_custom_call.1} parent=1 // pred_region
      _
    $region41: #{tpu_custom_call.1} parent=1 // pred_fallthru
      _
    // Predicated region
    $region42: #{tpu_custom_call.1} parent=1 // pred_check
      _
    $region43: #{tpu_custom_call.1} parent=1 // pred_check_branch
      %80 = sbr.rel (0) target = $region45
    $region44: #{tpu_custom_call.1} parent=1 // pred_region
      _
    $region45: #{tpu_custom_call.1} parent=1 // pred_fallthru
      _
    // Predicated region
    $region46: #{tpu_custom_call.1} parent=1 // pred_check
      _
    $region47: #{tpu_custom_call.1} parent=1 // pred_check_branch
      %82 = sbr.rel (0) target = $region49
    $region48: #{tpu_custom_call.1} parent=1 // pred_region
      _
    $region49: #{tpu_custom_call.1} parent=1 // pred_fallthru
      _
    // Predicated region
    $region50: #{tpu_custom_call.1} parent=1 // pred_check
      _
    $region51: #{tpu_custom_call.1} parent=1 // pred_check_branch
      %84 = sbr.rel (0) target = $region53
    $region52: #{tpu_custom_call.1} parent=1 // pred_region
      _
    $region53: #{tpu_custom_call.1} parent=1 // pred_fallthru
      _
    // Predicated region
    $region54: #{tpu_custom_call.1} parent=1 // pred_check
      _
    $region55: #{tpu_custom_call.1} parent=1 // pred_check_branch
      %86 = sbr.rel (0) target = $region57
    $region56: #{tpu_custom_call.1} parent=1 // pred_region
      %88 = dma.done [#allocation5], 256
    $region57: #{tpu_custom_call.1} parent=1 // pred_fallthru
      _
    // Predicated region
    $region58: #{tpu_custom_call.1} parent=1 // pred_check
      _
    $region59: #{tpu_custom_call.1} parent=1 // pred_check_branch
      %90 = sbr.rel (0) target = $region61
    $region60: #{tpu_custom_call.1} parent=1 // pred_region
      %92 = dma.done [#allocation8], 512
    $region61: #{tpu_custom_call.1} parent=1 // pred_fallthru
      _
    // Predicated region
    $region62: #{tpu_custom_call.1} parent=1 // pred_check
      _
    $region63: #{tpu_custom_call.1} parent=1 // pred_check_branch
      %94 = sbr.rel (0) target = $region65
    $region64: #{tpu_custom_call.1} parent=1 // pred_region
      %96 = dma.done [#allocation8], 256
    $region65: #{tpu_custom_call.1} parent=1 // pred_fallthru
      _
    %v97 = vld [vmem:[%s1] sm:$0x3]
    %v98 = vld [vmem:[#allocation4] sm:$0xff]
    %v99 = vld [vmem:[#allocation4 + $0x8] sm:$0xff]
    %v100 = vld [vmem:[%s2] sm:$0x3]
    %102 = vset.pattern.permute.xlu0 0
    %103 = vperm.xlu0 %102, %v100
    %v104 = vpop.permute.xlu0 %103
    %vm106 = vcmask 130048
    %v108 = vsel %vm106, %v97, 0
    %110 = vmatpush.msra.mxu0 0.0
    %111 = vmatpush.msra.mxu0 0.0
    %112 = vmatpush.msra.mxu0 0.0
    %113 = vmatpush.msra.mxu0 0.0
    %114 = vmatpush.msra.mxu0 0.0
    %115 = vmatpush.msra.mxu0 0.0
    %116 = vmatpush.msra.mxu0 0.0
    %117 = vmatpush.msra.mxu0 0.0
    %118 = vmatpush.msra.mxu0 0.0
    %119 = vmatpush.msra.mxu0 0.0
    %120 = vmatpush.msra.mxu0 0.0
    %121 = vmatpush.msra.mxu0 0.0
    %122 = vmatpush.msra.mxu0 0.0
    %123 = vmatpush.msra.mxu0 0.0
    %124 = vmatpush.msra.mxu0 %v99
    %125 = vmatpush.msra.mxu0 %v98
    %126 = vmatmul.f32.gmra.mxu0 %v108
    %v127 = vpop.f32.mrf.mxu0
    %v128 = vadd.f32 %v104, %v127
    %129 = vdwg.mxu0
    %v130 = vld [vmem:[%s3] sm:$0x1]
    %s131 = sld [smem:[#allocation2]]
    %v132 = vstv %s131
    %vm133 = vcmask 15360
    %v135 = vsel %vm133, %v130, 0
    %vm137 = vcmask 1041408
    %v139 = vsel %vm137, %v128, 0
    %141 = vmatpush.msra.mxu0 0.0
    %142 = vmatpush.msra.mxu0 0.0
    %143 = vmatpush.msra.mxu0 0.0
    %144 = vmatpush.msra.mxu0 0.0
    %145 = vmatpush.msra.mxu0 0.0
    %146 = vmatpush.msra.mxu0 0.0
    %147 = vmatpush.msra.mxu0 0.0
    %148 = vmatpush.msra.mxu0 0.0
    %149 = vmatpush.msra.mxu0 0.0
    %150 = vmatpush.msra.mxu0 0.0
    %151 = vmatpush.msra.mxu0 0.0
    %152 = vmatpush.msra.mxu0 0.0
    %153 = vmatpush.msra.mxu0 0.0
    %154 = vmatpush.msra.mxu0 0.0
    %155 = vmatpush.msra.mxu0 0.0
    %156 = vmatpush.msra.mxu0 %v139
    %157 = vmatmul.f32.gmra.mxu0 %v135
    %v158 = vpop.f32.mrf.mxu0
    %v159 = vadd.f32 %v132, %v158
    %160 = vdwg.mxu0
    %v161 = vtanh.pop %v159
    %v162 = vld [vmem:[#allocation7] sm:$0xff]
    %v163 = vld [vmem:[#allocation7 + $0x8] sm:$0xff]
    %v164 = vld [vmem:[#allocation7 + $0x10] sm:$0xff]
    %v165 = vld [vmem:[#allocation7 + $0x18] sm:$0x3]
    %v166 = vld [vmem:[%s5] sm:$0x1]
    %vm167 = vcmask 211968
    %v169 = vsel %vm167, %v161, 0
    %v172 = vsel %vm137, %v165, 0
    %174 = vmatpush.msra.mxu0 0.0
    %175 = vmatpush.msra.mxu0 0.0
    %176 = vmatpush.msra.mxu0 0.0
    %177 = vmatpush.msra.mxu0 0.0
    %178 = vmatpush.msra.mxu0 0.0
    %179 = vmatpush.msra.mxu0 0.0
    %180 = vmatpush.msra.mxu0 0.0
    %181 = vmatpush.msra.mxu0 0.0
    %182 = vmatpush.msra.mxu0 0.0
    %183 = vmatpush.msra.mxu0 0.0
    %184 = vmatpush.msra.mxu0 0.0
    %185 = vmatpush.msra.mxu0 0.0
    %186 = vmatpush.msra.mxu0 %v172
    %187 = vmatpush.msra.mxu0 %v164
    %188 = vmatpush.msra.mxu0 %v163
    %189 = vmatpush.msra.mxu0 %v162
    %190 = vmatmul.f32.gmra.mxu0 %v169
    %v191 = vpop.f32.mrf.mxu0
    %v192 = vadd.f32 %v166, %v191
    %193 = vdwg.mxu0
    %s194 = sld [smem:[#allocation3]]
    %vm195 = vcmp.ge.f32.partialorder %v192, 0.0
    %v196 = vstv %s194
    %v197 = vmul.f32 %v196, %v192
    %v198 = vsel %vm195, %v192, %v197
    %199 = vst [vmem:[#allocation10] sm:$0x1] %v198
    %v200 = vld [vmem:[#allocation9] sm:$0xff]
    %v201 = vld [vmem:[#allocation9 + $0x8] sm:$0x1f]
    %v202 = vld [vmem:[%s7] sm:$0x1]
    %v204 = vperm.slane %v202, 0
    %v206 = vmul.f32 %v200, %v204
    %v207 = vmul.f32 %v201, %v204
    %v208 = vld [vmem:[%s8] sm:$0x1]
    %v210 = vperm.slane %v208, 0
    %v212 = vadd.f32 %v206, %v210
    %v213 = vadd.f32 %v207, %v210
    %v214 = vtanh.pop %v212
    %v215 = vtanh.pop %v213
    %v216 = vld [vmem:[%s9] sm:$0x1]
    %v218 = vperm.slane %v216, 0
    %v220 = vmul.f32 %v214, %v218
    %v221 = vmul.f32 %v215, %v218
    %v222 = vld [vmem:[%s10] sm:$0x1]
    %v224 = vperm.slane %v222, 0
    %v226 = vadd.f32 %v220, %v224
    %v227 = vadd.f32 %v221, %v224
    %v228 = vtanh.pop %v226
    %v229 = vtanh.pop %v227
    %230 = vst.msk [vmem:[#allocation11] sm:$0xff] %vm106, %v228
    %vm231 = vcmask 126976
    %232 = vst.msk [vmem:[#allocation11 + $0x8] sm:$0x1f] %vm231, %v229
    // Predicated region
    $region66: #{tpu_custom_call.1} parent=1 // pred_check
      _
    $region67: #{tpu_custom_call.1} parent=1 // pred_check_branch
      %234 = sbr.rel (0) target = $region69
    $region68: #{tpu_custom_call.1} parent=1 // pred_region
      %236 = vsyncadd [#allocation6], 0
      %s238 = sshll.u32 [#allocation10], 4
      %s239 = int_to_ptr.vmem [resolvable:$true] %s238
      %s240 = sshll.u32 %s13, 4
      %s241 = int_to_ptr.hbm [resolvable:$true] %s240
      %243 = dma.vmem_to_hbm [thread:$0]  %s239, 16, %s241, [#allocation6]
    $region69: #{tpu_custom_call.1} parent=1 // pred_fallthru
      _
    // Predicated region
    $region70: #{tpu_custom_call.1} parent=1 // pred_check
      _
    $region71: #{tpu_custom_call.1} parent=1 // pred_check_branch
      %245 = sbr.rel (0) target = $region73
    $region72: #{tpu_custom_call.1} parent=1 // pred_region
      %247 = vsyncadd [#allocation12], 0
      %s248 = sshll.u32 [#allocation11], 4
      %s249 = int_to_ptr.vmem [resolvable:$true] %s248
      %s250 = sshll.u32 %s14, 4
      %s251 = int_to_ptr.hbm [resolvable:$true] %s250
      %256 = dma.vmem_to_hbm [thread:$0]  %s249, 256, %s251, [#allocation12], 128, 128, 8
    $region73: #{tpu_custom_call.1} parent=1 // pred_fallthru
      _
    // Predicated region
    $region74: #{tpu_custom_call.1} parent=1 // pred_check
      _
    $region75: #{tpu_custom_call.1} parent=1 // pred_check_branch
      %258 = sbr.rel (0) target = $region77
    $region76: #{tpu_custom_call.1} parent=1 // pred_region
      %260 = dma.done [#allocation6], 16
    $region77: #{tpu_custom_call.1} parent=1 // pred_fallthru
      _
    // Predicated region
    $region78: #{tpu_custom_call.1} parent=1 // pred_check
      _
    $region79: #{tpu_custom_call.1} parent=1 // pred_check_branch
      %262 = sbr.rel (0) target = $region81
    $region80: #{tpu_custom_call.1} parent=1 // pred_region
      %264 = dma.done [#allocation12], 256
    $region81: #{tpu_custom_call.1} parent=1 // pred_fallthru
      _
    %265 = vsyncpa [#allocation5], 1
    %266 = vsyncpa [#allocation8], 1
    %267 = vsyncpa [#allocation6], 1
    %268 = vsyncpa [#allocation12], 1

</llo_original>
